<compile_context>
chip_gen: v6e
topology: v6e:2x2x1
jax: 0.10.0
libtpu: 0.0.40
codegen_flags: <defaults>
</compile_context>

<pallas_src>
import functools

import jax
import jax.numpy as jnp
from jax.experimental import pallas as pl
from jax.experimental.pallas import tpu as pltpu

# ---- packed-slab layout (all row offsets are multiples of 8) ---------------
LANE = 128          # lane width: n_units (16) and hidden width pad to this
OBS_PAD = 8         # n_observations (4) padded only to one sublane group
W123_ROW = 0        # folded W1@W2@W3, stored in rows [0, 8)   (only n_obs rows used)
W4_ROW = 8          # W4, stored in rows [8, 136)              (only n_units rows used)
B123_ROW = 136      # folded bias for layers 1-3, one row
B4_ROW = 144        # bias of the final layer, one row
SLAB_ROWS = 152     # 152 = 19 * 8  (sublane aligned), 76 KiB f32


def dqn_kernel(x_ref, slab_ref, o_ref, *, n_actions):
    # Static slices of the packed parameter slab (zero-cost views -> loads).
    w123 = slab_ref[W123_ROW:W123_ROW + OBS_PAD, :]   # (8, 128)
    w4 = slab_ref[W4_ROW:W4_ROW + LANE, :]            # (128, 128)
    b123 = slab_ref[B123_ROW:B123_ROW + 1, :]         # (1, 128)
    b4 = slab_ref[B4_ROW:B4_ROW + 1, :]               # (1, 128)

    # Folded Linear1->Linear2->Linear3 (exact: no nonlinearity in between).
    # x is zero-padded on its feature axis; the matching slab rows are zero.
    h = jnp.dot(x_ref[...], w123, preferred_element_type=jnp.float32) + b123
    # The module's single ReLU, before the final Linear.
    h = jnp.maximum(h, 0.0)
    # Final Linear(n_units -> n_actions); only the real lanes are stored, so
    # the writeback DMA moves n_actions * 4 bytes per row.
    q = jnp.dot(h, w4, preferred_element_type=jnp.float32) + b4
    o_ref[...] = q[:, :n_actions]


def _round_up(x, m):
    return (x + m - 1) // m * m


def pack_params(params):
    """Fold layers 1-3 and pack everything into one lane-dense f32 slab.

    params: [(W1,b1), (W2,b2), (W3,b3), (W4,b4)], W stored as (in, out),
    b stored as (1, out).  Done once, outside the kernel.
    """
    (w1, b1), (w2, b2), (w3, b3), (w4, b4) = params
    assert w1.shape[0] <= OBS_PAD and w4.shape[0] <= LANE and w4.shape[1] <= LANE
    w123 = w1 @ w2 @ w3
    b123 = (b1 @ w2 + b2) @ w3 + b3
    slab = jnp.zeros((SLAB_ROWS, LANE), jnp.float32)
    slab = slab.at[W123_ROW:W123_ROW + w123.shape[0], :w123.shape[1]].set(w123)
    slab = slab.at[W4_ROW:W4_ROW + w4.shape[0], :w4.shape[1]].set(w4)
    slab = slab.at[B123_ROW:B123_ROW + 1, :b123.shape[1]].set(b123)
    slab = slab.at[B4_ROW:B4_ROW + 1, :b4.shape[1]].set(b4)
    return slab


def dqn_forward(x, slab, n_actions):
    """x: (batch, n_observations) f32.  slab: packed params from pack_params."""
    batch, n_obs = x.shape
    assert n_obs <= OBS_PAD

    # --- batch tile selection --------------------------------------------
    b_pad = _round_up(batch, 8)
    if b_pad <= 256:
        # Small batch: single grid step, the call is launch-overhead-bound.
        tb = b_pad
    else:
        # Large batch: big tiles (amortize ~0.35 us/step on v5e/v6e) but at
        # least 2 grid steps so v7x's two TensorCores split the work.
        tb = min(1024, _round_up(-(-b_pad // 2), 8))
        b_pad = _round_up(b_pad, tb)
    grid = (b_pad // tb,)

    # Tiny pad: batch to a sublane multiple, features 4 -> 8 lanes.  Extra
    # lanes/rows are zero so they contribute nothing (matching slab rows are
    # zero); the pad itself may fuse into the pallas_call operand.
    x_in = jnp.zeros((b_pad, OBS_PAD), jnp.float32).at[:batch, :n_obs].set(x)

    # Advisory cost for XLA scheduling: actual kernel DMA traffic / MXU work.
    flops = 2 * b_pad * LANE * (OBS_PAD + LANE)
    bytes_accessed = (b_pad * OBS_PAD + SLAB_ROWS * LANE + b_pad * n_actions) * 4

    out = pl.pallas_call(
        functools.partial(dqn_kernel, n_actions=n_actions),
        out_shape=jax.ShapeDtypeStruct((b_pad, n_actions), jnp.float32),
        grid=grid,
        in_specs=[
            # batch tile of activations (feature axis = full extent, 8 lanes)
            pl.BlockSpec((tb, OBS_PAD), lambda i: (i, 0)),
            # parameter slab: constant index_map -> stays VMEM-resident
            pl.BlockSpec((SLAB_ROWS, LANE), lambda i: (0, 0)),
        ],
        # narrow output: full-extent last dim, DMA moves only the real lanes
        out_specs=pl.BlockSpec((tb, n_actions), lambda i: (i, 0)),
        compiler_params=pltpu.CompilerParams(
            dimension_semantics=("parallel",),      # v7x: 2 TCs split the grid
            allow_input_fusion=[True, False],       # fuse the x pad, not the slab
        ),
        cost_estimate=pl.CostEstimate(
            flops=flops, transcendentals=0, bytes_accessed=bytes_accessed),
    )(x_in, slab)

    # Only the (cheap) batch-axis padding is stripped; no lane slice needed.
    if b_pad != batch:
        out = out[:batch]
    return out


# Keep pad -> pallas_call -> slice fused inside one jit.
dqn_forward_jit = jax.jit(dqn_forward, static_argnames=("n_actions",))


def init_linear(key, fan_in, fan_out):
    """PyTorch nn.Linear default init (U(-k, k), k=1/sqrt(fan_in)); W as (in, out)."""
    kw, kb = jax.random.split(key)
    bound = 1.0 / jnp.sqrt(jnp.float32(fan_in))
    w = jax.random.uniform(kw, (fan_in, fan_out), jnp.float32, -bound, bound)
    b = jax.random.uniform(kb, (1, fan_out), jnp.float32, -bound, bound)
    return w, b


def reference_forward(x, params):
    """Unfused pure-JAX reference matching the PyTorch module exactly."""
    (w1, b1), (w2, b2), (w3, b3), (w4, b4) = params
    h = x @ w1 + b1
    h = h @ w2 + b2
    h = h @ w3 + b3
    h = jnp.maximum(h, 0.0)
    return h @ w4 + b4


if __name__ == "__main__":
    # Small shapes implied by the module: the TriangleTask state is a short
    # feature vector and the action space is small.
    batch = 8
    n_observations = 4
    n_actions = 3
    n_units = 16

    key = jax.random.PRNGKey(0)
    kx, k1, k2, k3, k4, kx2 = jax.random.split(key, 6)

    x = jax.random.normal(kx, (batch, n_observations), jnp.float32)
    params = [
        init_linear(k1, n_observations, n_units),
        init_linear(k2, n_units, n_units),
        init_linear(k3, n_units, n_units),
        init_linear(k4, n_units, n_actions),
    ]

    slab = pack_params(params)            # fold + pack once, outside the kernel

    # Small-batch path (single grid step).
    out = dqn_forward_jit(x, slab, n_actions=n_actions)
    out = jax.block_until_ready(out)
    ref = reference_forward(x, params)
    assert out.shape == (batch, n_actions)
    assert jnp.allclose(out, ref, atol=1e-4, rtol=1e-4), (
        f"max abs err {jnp.max(jnp.abs(out - ref))}")

    # Larger batch path (multi-step grid, batch padding exercised).
    batch_big = 600
    x_big = jax.random.normal(kx2, (batch_big, n_observations), jnp.float32)
    out_big = dqn_forward_jit(x_big, slab, n_actions=n_actions)
    out_big = jax.block_until_ready(out_big)
    ref_big = reference_forward(x_big, params)
    assert out_big.shape == (batch_big, n_actions)
    assert jnp.allclose(out_big, ref_big, atol=1e-4, rtol=1e-4), (
        f"max abs err {jnp.max(jnp.abs(out_big - ref_big))}")

    print("KERNEL_OK")
</pallas_src>

<mosaic_0001>
module attributes {stable_mosaic.version = 11 : i64} {
  func.func @dqn_kernel(%arg0: i32, %arg1: memref<8x8xf32, #tpu.memory_space<vmem>>, %arg2: memref<152x128xf32, #tpu.memory_space<vmem>>, %arg3: memref<8x3xf32, #tpu.memory_space<vmem>>) attributes {dimension_semantics = [#tpu.dimension_semantics<parallel>], iteration_bounds = array<i64: 1>, scalar_prefetch = 0 : i64, scratch_operands = 0 : i64, tpu.core_type = #tpu.core_type<tc>, window_params = [{transform_indices = @transform_0, window_bounds = array<i64: 8, 8>}, {pipeline_mode = #tpu.pipeline_mode<synchronous>, transform_indices = @transform_1, window_bounds = array<i64: 152, 128>}, {transform_indices = @transform_2, window_bounds = array<i64: 8, 3>}]} {
    %c0 = arith.constant 0 : index
    %c0_0 = arith.constant 0 : index
    %0 = vector.load %arg2[%c0, %c0_0] : memref<152x128xf32, #tpu.memory_space<vmem>>, vector<8x128xf32>
    %c8 = arith.constant 8 : index
    %c0_1 = arith.constant 0 : index
    %1 = vector.load %arg2[%c8, %c0_1] : memref<152x128xf32, #tpu.memory_space<vmem>>, vector<128x128xf32>
    %c136 = arith.constant 136 : index
    %c0_2 = arith.constant 0 : index
    %2 = vector.load %arg2[%c136, %c0_2] : memref<152x128xf32, #tpu.memory_space<vmem>>, vector<1x128xf32>
    %c144 = arith.constant 144 : index
    %c0_3 = arith.constant 0 : index
    %3 = vector.load %arg2[%c144, %c0_3] : memref<152x128xf32, #tpu.memory_space<vmem>>, vector<1x128xf32>
    %c0_4 = arith.constant 0 : index
    %c0_5 = arith.constant 0 : index
    %4 = vector.load %arg1[%c0_4, %c0_5] : memref<8x8xf32, #tpu.memory_space<vmem>>, vector<8x8xf32>
    %cst = arith.constant dense<0.000000e+00> : vector<8x128xf32>
    %5 = tpu.matmul %4, %0, %cst {dimension_numbers = #tpu.dot_dimension_numbers<[1], [0], [0], [1], [0, 0, 1, 1], [], []>} : vector<8x8xf32>, vector<8x128xf32>, vector<8x128xf32> -> vector<8x128xf32>
    %6 = vector.broadcast %2 : vector<1x128xf32> to vector<8x128xf32>
    %7 = arith.addf %5, %6 : vector<8x128xf32>
    %cst_6 = arith.constant 0.000000e+00 : f32
    %8 = vector.broadcast %cst_6 : f32 to vector<8x128xf32>
    %9 = arith.maximumf %7, %8 : vector<8x128xf32>
    %cst_7 = arith.constant dense<0.000000e+00> : vector<8x128xf32>
    %10 = tpu.matmul %9, %1, %cst_7 {dimension_numbers = #tpu.dot_dimension_numbers<[1], [0], [0], [1], [0, 0, 1, 1], [], []>} : vector<8x128xf32>, vector<128x128xf32>, vector<8x128xf32> -> vector<8x128xf32>
    %11 = vector.broadcast %3 : vector<1x128xf32> to vector<8x128xf32>
    %12 = arith.addf %10, %11 : vector<8x128xf32>
    %13 = vector.extract_strided_slice %12 {offsets = [0, 0], sizes = [8, 3], strides = [1, 1]} : vector<8x128xf32> to vector<8x3xf32>
    %c0_8 = arith.constant 0 : index
    %c0_9 = arith.constant 0 : index
    %14 = vector.load %arg3[%c0_8, %c0_9] : memref<8x3xf32, #tpu.memory_space<vmem>>, vector<8x3xf32>
    tpu.vector_store %arg3[%c0_8, %c0_9], %13 {strides = array<i32>} : memref<8x3xf32, #tpu.memory_space<vmem>>, vector<8x3xf32>,
    return
  }
  func.func @transform_0(%arg0: i32) -> (i32, i32) {
    %c0_i32 = arith.constant 0 : i32
    %c0_i32_0 = arith.constant 0 : i32
    return %arg0, %c0_i32 : i32, i32
  }
  func.func @transform_1(%arg0: i32) -> (i32, i32) {
    %c0_i32 = arith.constant 0 : i32
    %c0_i32_0 = arith.constant 0 : i32
    %c0_i32_1 = arith.constant 0 : i32
    return %c0_i32, %c0_i32_0 : i32, i32
  }
  func.func @transform_2(%arg0: i32) -> (i32, i32) {
    %c0_i32 = arith.constant 0 : i32
    %c0_i32_0 = arith.constant 0 : i32
    return %arg0, %c0_i32 : i32, i32
  }
}

</mosaic_0001>

<llo_original>
// kernel: dqn_forward.2
$region0: #{dqn_forward.2}
  #allocation0 [shape = 'u32[]', space=smem, size = 0x4, offset = 0x4, fixed_abs, tag = 'smem constant byte address 0x4 - core index']
  #allocation1 [shape = 'u32[144,128]{1,0:T(1,128)}', space=vmem, size = 0x12000, scoped, tag = 'internal scratch']
  #allocation2 [shape = 'u32[2048]{0}', space=vmem, size = 0x2000, scoped, tag = 'scoped memory for dqn_forward.2']
  #allocation3 [shape = 'u32[2048]{0}', space=vmem, size = 0x2000, scoped, tag = 'scoped memory for dqn_forward.2']
  #allocation4 [shape = 'u32[2048]{0}', space=vmem, size = 0x2000, scoped, tag = 'scoped memory for dqn_forward.2']
  #allocation5 [shape = 'u32[2048]{0}', space=vmem, size = 0x2000, scoped, tag = 'scoped memory for dqn_forward.2']
  #allocation6 [shape = 'u32[2048]{0}', space=vmem, size = 0x2000, scoped, tag = 'scoped memory for dqn_forward.2']
  %s0 = inlined_call_operand.hbm [shape: f32[152,128], index: 0, kind: input, shape index: {}]
  %s1 = inlined_call_operand.vmem [shape: f32[8,4], index: 1, kind: input, shape index: {}]
  %s2 = inlined_call_operand.<no memory space> [shape: f32[], index: 2, kind: input, shape index: {}]
  %s3 = inlined_call_operand.vmem [shape: f32[8,3], index: 3, kind: output, shape index: {}]
  %s4 = sld [smem:[#allocation0]]
  $region22: #{dqn_forward.2} parent=0
    _
  %s6 = ssub.s32 1, %s4
  %s7 = scalar_select 0, %s6, %s4
  %v8 = vstv %s2
  $region1: #{dqn_forward.2} parent=0
    #allocation7 [shape = 'u8[77824]{0}', space=vmem, size = 0x13000, scoped, tag = 'input window, operand 1, single buffered']
    #allocation8 [shape = 's32[1]{0}', space=sflag, size = 0x4, scoped, tag = 'scoped memory for dqn_forward.2']
    #allocation9 [shape = 'u8[4096]{0}', space=vmem, size = 0x1000, dematerialized = true, scoped, tag = 'FusionAdapter Buffer %fusion.1 = f32[8,8]{1,0:T(8,128)} fusion(%param_1.1, %param_2), kind=kLoop, calls=%fused_computation.1.clone, metadata={op_name="jit(dqn_forward)/scatter" stack_frame_id=7}']
    %9 = vsyncpa [#allocation8], 0
    // Predicated region
    $region2: #{dqn_forward.2} parent=1 // pred_check
      _
    $region3: #{dqn_forward.2} parent=1 // pred_check_branch
      %11 = sbr.rel (0) target = $region5
    $region4: #{dqn_forward.2} parent=1 // pred_region
      _
    $region5: #{dqn_forward.2} parent=1 // pred_fallthru
      _
    // Predicated region
    $region6: #{dqn_forward.2} parent=1 // pred_check
      _
    $region7: #{dqn_forward.2} parent=1 // pred_check_branch
      %13 = sbr.rel (0) target = $region9
    $region8: #{dqn_forward.2} parent=1 // pred_region
      %s15 = ssub.s32 2432, 2432
      %16 = vsyncadd [#allocation8], %s15
      %s17 = sshll.u32 [#allocation7], 4
      %s18 = int_to_ptr.vmem [resolvable:$true] %s17
      %23 = dma.hbm_to_vmem [thread:$0]  %s0, 2432, %s18, [#allocation8], 128, 128, 8
    $region9: #{dqn_forward.2} parent=1 // pred_fallthru
      _
    // Predicated region
    $region10: #{dqn_forward.2} parent=1 // pred_check
      _
    $region11: #{dqn_forward.2} parent=1 // pred_check_branch
      %25 = sbr.rel (0) target = $region13
    $region12: #{dqn_forward.2} parent=1 // pred_region
      %26 = dma.done [#allocation8], 2432
    $region13: #{dqn_forward.2} parent=1 // pred_fallthru
      _
    %v27 = vld [vmem:[%s1] sm:$0xff]
    %v28 = vlaneseq
    %v29 = vand.u32 %v28, 127
    %vm31 = vcmp.lt.s32.totalorder %v29, 4
    %v32 = vsel %vm31, %v27, %v8
    %s34 = ssub.s32 256, 1
    %35 = vst [vmem:[#allocation9] sm:%s34] %v32
    %v36 = vld [vmem:[#allocation7] sm:$0xff]
    %v37 = vld [vmem:[#allocation7 + $0x8] sm:$0xff]
    %v38 = vld [vmem:[#allocation7 + $0x10] sm:$0xff]
    %v39 = vld [vmem:[#allocation7 + $0x18] sm:$0xff]
    %v40 = vld [vmem:[#allocation7 + $0x20] sm:$0xff]
    %v41 = vld [vmem:[#allocation7 + $0x28] sm:$0xff]
    %v42 = vld [vmem:[#allocation7 + $0x30] sm:$0xff]
    %v43 = vld [vmem:[#allocation7 + $0x38] sm:$0xff]
    %v44 = vld [vmem:[#allocation7 + $0x40] sm:$0xff]
    %v45 = vld [vmem:[#allocation7 + $0x48] sm:$0xff]
    %v46 = vld [vmem:[#allocation7 + $0x50] sm:$0xff]
    %v47 = vld [vmem:[#allocation7 + $0x58] sm:$0xff]
    %v48 = vld [vmem:[#allocation7 + $0x60] sm:$0xff]
    %v49 = vld [vmem:[#allocation7 + $0x68] sm:$0xff]
    %v50 = vld [vmem:[#allocation7 + $0x70] sm:$0xff]
    %v51 = vld [vmem:[#allocation7 + $0x78] sm:$0xff]
    %v52 = vld [vmem:[#allocation7 + $0x80] sm:$0xff]
    %v53 = vld [vmem:[#allocation7 + $0x88] sm:$0x1]
    %v54 = vld [vmem:[#allocation7 + $0x90] sm:$0x1]
    %v55 = vld [vmem:[#allocation9] sm:$0xff]
    %v56 = vlaneseq
    %v57 = vshrl.u32 %v56, 7
    %v58 = vsub.s32 0, %v57
    %v59 = vrot.slane %v53, %v58
    %vm60 = vcmask 64512
    %v62 = vsel %vm60, %v55, 0
    %64 = vmatprep.subr.mxu0 0.0
    %65 = vmatpush1.msra.mxu0 0.0
    %66 = vmatprep.subr.mxu0 0.0
    %67 = vmatpush1.msra.mxu0 0.0
    %68 = vmatprep.subr.mxu0 0.0
    %69 = vmatpush1.msra.mxu0 0.0
    %70 = vmatprep.subr.mxu0 0.0
    %71 = vmatpush1.msra.mxu0 0.0
    %72 = vmatprep.subr.mxu0 0.0
    %73 = vmatpush1.msra.mxu0 0.0
    %74 = vmatprep.subr.mxu0 0.0
    %75 = vmatpush1.msra.mxu0 0.0
    %76 = vmatprep.subr.mxu0 0.0
    %77 = vmatpush1.msra.mxu0 0.0
    %78 = vmatprep.subr.mxu0 0.0
    %79 = vmatpush1.msra.mxu0 0.0
    %80 = vmatprep.subr.mxu0 0.0
    %81 = vmatpush1.msra.mxu0 0.0
    %82 = vmatprep.subr.mxu0 0.0
    %83 = vmatpush1.msra.mxu0 0.0
    %84 = vmatprep.subr.mxu0 0.0
    %85 = vmatpush1.msra.mxu0 0.0
    %86 = vmatprep.subr.mxu0 0.0
    %87 = vmatpush1.msra.mxu0 0.0
    %88 = vmatprep.subr.mxu0 0.0
    %89 = vmatpush1.msra.mxu0 0.0
    %90 = vmatprep.subr.mxu0 0.0
    %91 = vmatpush1.msra.mxu0 0.0
    %92 = vmatprep.subr.mxu0 0.0
    %93 = vmatpush1.msra.mxu0 0.0
    %94 = vmatprep.subr.mxu0 0.0
    %95 = vmatpush1.msra.mxu0 %v36
    %96 = vmatprep.subr.mxu0 0.0
    %97 = vmatpush2.msra.mxu0 0.0
    %98 = vmatprep.subr.mxu0 0.0
    %99 = vmatpush2.msra.mxu0 0.0
    %100 = vmatprep.subr.mxu0 0.0
    %101 = vmatpush2.msra.mxu0 0.0
    %102 = vmatprep.subr.mxu0 0.0
    %103 = vmatpush2.msra.mxu0 0.0
    %104 = vmatprep.subr.mxu0 0.0
    %105 = vmatpush2.msra.mxu0 0.0
    %106 = vmatprep.subr.mxu0 0.0
    %107 = vmatpush2.msra.mxu0 0.0
    %108 = vmatprep.subr.mxu0 0.0
    %109 = vmatpush2.msra.mxu0 0.0
    %110 = vmatprep.subr.mxu0 0.0
    %111 = vmatpush2.msra.mxu0 0.0
    %112 = vmatprep.subr.mxu0 0.0
    %113 = vmatpush2.msra.mxu0 0.0
    %114 = vmatprep.subr.mxu0 0.0
    %115 = vmatpush2.msra.mxu0 0.0
    %116 = vmatprep.subr.mxu0 0.0
    %117 = vmatpush2.msra.mxu0 0.0
    %118 = vmatprep.subr.mxu0 0.0
    %119 = vmatpush2.msra.mxu0 0.0
    %120 = vmatprep.subr.mxu0 0.0
    %121 = vmatpush2.msra.mxu0 0.0
    %122 = vmatprep.subr.mxu0 0.0
    %123 = vmatpush2.msra.mxu0 0.0
    %124 = vmatprep.subr.mxu0 0.0
    %125 = vmatpush2.msra.mxu0 0.0
    %126 = vmatprep.subr.mxu0 0.0
    %127 = vmatpush2.msra.mxu0 0.0
    %128 = vmatprep.mubr.f32.mxu0 0.0
    %129 = vmatmul.mubr.f32.gmra.mxu0 %v62
    %v130 = vpop.f32.mrf.mxu0
    %v131 = vadd.f32 %v59, %v130
    %v132 = vpop.f32.mrf.mxu0
    %133 = vdwg.mxu0
    %v134 = vmax.f32 %v131, 0.0
    %v135 = vlaneseq
    %v136 = vshrl.u32 %v135, 7
    %v137 = vsub.s32 0, %v136
    %v138 = vrot.slane %v54, %v137
    %139 = vmatprep.subr.mxu0 0.0
    %140 = vmatpush1.msra.mxu0 %v52
    %141 = vmatprep.subr.mxu0 0.0
    %142 = vmatpush1.msra.mxu0 %v51
    %143 = vmatprep.subr.mxu0 0.0
    %144 = vmatpush1.msra.mxu0 %v50
    %145 = vmatprep.subr.mxu0 0.0
    %146 = vmatpush1.msra.mxu0 %v49
    %147 = vmatprep.subr.mxu0 0.0
    %148 = vmatpush1.msra.mxu0 %v48
    %149 = vmatprep.subr.mxu0 0.0
    %150 = vmatpush1.msra.mxu0 %v47
    %151 = vmatprep.subr.mxu0 0.0
    %152 = vmatpush1.msra.mxu0 %v46
    %153 = vmatprep.subr.mxu0 0.0
    %154 = vmatpush1.msra.mxu0 %v45
    %155 = vmatprep.subr.mxu0 0.0
    %156 = vmatpush1.msra.mxu0 %v44
    %157 = vmatprep.subr.mxu0 0.0
    %158 = vmatpush1.msra.mxu0 %v43
    %159 = vmatprep.subr.mxu0 0.0
    %160 = vmatpush1.msra.mxu0 %v42
    %161 = vmatprep.subr.mxu0 0.0
    %162 = vmatpush1.msra.mxu0 %v41
    %163 = vmatprep.subr.mxu0 0.0
    %164 = vmatpush1.msra.mxu0 %v40
    %165 = vmatprep.subr.mxu0 0.0
    %166 = vmatpush1.msra.mxu0 %v39
    %167 = vmatprep.subr.mxu0 0.0
    %168 = vmatpush1.msra.mxu0 %v38
    %169 = vmatprep.subr.mxu0 0.0
    %170 = vmatpush1.msra.mxu0 %v37
    %171 = vmatprep.subr.mxu0 0.0
    %172 = vmatpush2.msra.mxu0 0.0
    %173 = vmatprep.subr.mxu0 0.0
    %174 = vmatpush2.msra.mxu0 0.0
    %175 = vmatprep.subr.mxu0 0.0
    %176 = vmatpush2.msra.mxu0 0.0
    %177 = vmatprep.subr.mxu0 0.0
    %178 = vmatpush2.msra.mxu0 0.0
    %179 = vmatprep.subr.mxu0 0.0
    %180 = vmatpush2.msra.mxu0 0.0
    %181 = vmatprep.subr.mxu0 0.0
    %182 = vmatpush2.msra.mxu0 0.0
    %183 = vmatprep.subr.mxu0 0.0
    %184 = vmatpush2.msra.mxu0 0.0
    %185 = vmatprep.subr.mxu0 0.0
    %186 = vmatpush2.msra.mxu0 0.0
    %187 = vmatprep.subr.mxu0 0.0
    %188 = vmatpush2.msra.mxu0 0.0
    %189 = vmatprep.subr.mxu0 0.0
    %190 = vmatpush2.msra.mxu0 0.0
    %191 = vmatprep.subr.mxu0 0.0
    %192 = vmatpush2.msra.mxu0 0.0
    %193 = vmatprep.subr.mxu0 0.0
    %194 = vmatpush2.msra.mxu0 0.0
    %195 = vmatprep.subr.mxu0 0.0
    %196 = vmatpush2.msra.mxu0 0.0
    %197 = vmatprep.subr.mxu0 0.0
    %198 = vmatpush2.msra.mxu0 0.0
    %199 = vmatprep.subr.mxu0 0.0
    %200 = vmatpush2.msra.mxu0 0.0
    %201 = vmatprep.subr.mxu0 0.0
    %202 = vmatpush2.msra.mxu0 0.0
    %203 = vmatprep.mubr.f32.mxu0 0.0
    %204 = vmatmul.mubr.f32.gmra.mxu0 %v134
    %v205 = vpop.f32.mrf.mxu0
    %v206 = vadd.f32 %v138, %v205
    %v207 = vpop.f32.mrf.mxu0
    %208 = vdwg.mxu0
    %vm209 = vcmask 23552
    %210 = vst.msk [vmem:[%s3] sm:$0xff] %vm209, %v206
    // Predicated region
    $region14: #{dqn_forward.2} parent=1 // pred_check
      _
    $region15: #{dqn_forward.2} parent=1 // pred_check_branch
      %212 = sbr.rel (0) target = $region17
    $region16: #{dqn_forward.2} parent=1 // pred_region
      _
    $region17: #{dqn_forward.2} parent=1 // pred_fallthru
      _
    // Predicated region
    $region18: #{dqn_forward.2} parent=1 // pred_check
      _
    $region19: #{dqn_forward.2} parent=1 // pred_check_branch
      %214 = sbr.rel (0) target = $region21
    $region20: #{dqn_forward.2} parent=1 // pred_region
      _
    $region21: #{dqn_forward.2} parent=1 // pred_fallthru
      _
    %215 = vsyncpa [#allocation8], 1

</llo_original>
